<compile_context>
chip_gen: v7x
topology: tpu7x:2x2x1
jax: 0.10.0
libtpu: 0.0.40
codegen_flags: <defaults>
</compile_context>

<pallas_src>
import functools

import jax
import jax.numpy as jnp
from jax.experimental import pallas as pl
from jax.experimental.pallas import tpu as pltpu

_NEG = -1e30          # "minus infinity" that stays finite through one more add
_NUM_CORES = 2        # leading "parallel" grid axis: sharded across v7x's two
                      # TensorCores; runs sequentially (still correct) elsewhere


def _contrastive_loss_kernel(diag_col_ref, diag_row_ref, scores_ref, out_ref,
                             *opt_refs, max_violation, tiles_per_core,
                             tile_rows):
    i = pl.program_id(1)

    @pl.when(i == 0)
    def _init():
        out_ref[...] = jnp.zeros_like(out_ref)
        if max_violation:
            opt_refs[0][...] = jnp.zeros_like(opt_refs[0])

    s = scores_ref[...].astype(jnp.float32)   # (TM, N) row tile
    d1 = diag_col_ref[...]                    # (TM, 1): margin - diag[row]
    d2 = diag_row_ref[...]                    # (1,  N): margin - diag[col]

    if max_violation:
        col_max_ref = opt_refs[0]
        # Mask positive pairs once on the shared tile: 1 compare + 1 select.
        block = pl.program_id(0) * tiles_per_core + i
        row_idx = (jax.lax.broadcasted_iota(jnp.int32, (tile_rows, 1), 0)
                   + block * tile_rows)
        col_idx = jax.lax.broadcasted_iota(jnp.int32, (1, s.shape[1]), 1)
        s = jnp.where(row_idx == col_idx, jnp.float32(_NEG), s)

        cost_s = jnp.maximum(s + d1, 0.0)     # caption retrieval
        cost_im = jnp.maximum(s + d2, 0.0)    # image retrieval

        # Row (axis=1) max feeds the running scalar sum directly; column
        # (axis=0) max is carried per-core in a resident (1, N) output row and
        # combined across cores in the wrapper.
        out_ref[...] += jnp.sum(jnp.max(cost_s, axis=1, keepdims=True),
                                keepdims=True)
        col_max_ref[...] = jnp.maximum(
            col_max_ref[...], jnp.max(cost_im, axis=0, keepdims=True))
    else:
        # No diagonal masking on the sum path: each real diagonal element of
        # both cost matrices contributes exactly max(margin, 0); the wrapper
        # subtracts the closed-form correction once.
        cost_s = jnp.maximum(s + d1, 0.0)
        cost_im = jnp.maximum(s + d2, 0.0)
        out_ref[...] += jnp.sum(cost_s + cost_im, keepdims=True)


def _pick_tile_rows(n):
    """Row-tile height: a multiple of 8, budgeted in f32 terms (~4 MiB/tile,
    since the kernel upcasts the tile and holds (TM, N) f32 temporaries), and
    no taller than half the matrix so both grid-parallel cores get real rows."""
    budget_f32 = 4 * 1024 * 1024
    cap = max(8, (budget_f32 // (4 * max(n, 1))) // 8 * 8)
    half = -(-n // 2)
    half8 = -(-half // 8) * 8
    return max(8, min(cap, half8))


def contrastive_loss(scores, margin=0.0, max_violation=False):
    """Pallas equivalent of ContrastiveLoss(opt, margin, max_violation)(scores)."""
    n = scores.shape[0]
    assert scores.shape == (n, n), "scores must be square (N, N)"
    itemsize = jnp.dtype(scores.dtype).itemsize

    tm = _pick_tile_rows(n)
    chunk = _NUM_CORES * tm
    n_pad = -(-n // chunk) * chunk
    tiles_per_core = (n_pad // tm) // _NUM_CORES
    pad_rows = n_pad - n

    # Precompute (margin - diag) once outside the kernel (N values) instead of
    # an in-kernel per-element add plus N^2 masked-reduce passes.
    diag = jnp.diagonal(scores).astype(jnp.float32)
    folded = jnp.float32(margin) - diag
    diag_row = folded.reshape(1, n)
    if pad_rows:
        # Padded rows/diag entries contribute exactly 0 to every cost term.
        diag_col = jnp.pad(folded, (0, pad_rows),
                           constant_values=_NEG).reshape(n_pad, 1)
        scores_p = jnp.pad(scores, ((0, pad_rows), (0, 0)),
                           constant_values=_NEG)
    else:
        diag_col = folded.reshape(n, 1)
        scores_p = scores

    kernel = functools.partial(
        _contrastive_loss_kernel,
        max_violation=bool(max_violation),
        tiles_per_core=tiles_per_core,
        tile_rows=tm,
    )

    row_map = lambda c, i: (c * tiles_per_core + i, 0)
    in_specs = [
        pl.BlockSpec((tm, 1), row_map),               # margin - diag, row tile
        pl.BlockSpec((1, n), lambda c, i: (0, 0)),    # margin - diag, resident
        pl.BlockSpec((tm, n), row_map),               # streaming scores tile
    ]
    out_shape = [jax.ShapeDtypeStruct((_NUM_CORES, 1, 1), jnp.float32)]
    out_specs = [pl.BlockSpec((pl.Squeezed(), 1, 1), lambda c, i: (c, 0, 0))]
    if max_violation:
        out_shape.append(jax.ShapeDtypeStruct((_NUM_CORES, 1, n), jnp.float32))
        out_specs.append(pl.BlockSpec((pl.Squeezed(), 1, n),
                                      lambda c, i: (c, 0, 0)))

    outs = pl.pallas_call(
        kernel,
        out_shape=out_shape,
        grid=(_NUM_CORES, tiles_per_core),
        in_specs=in_specs,
        out_specs=out_specs,
        compiler_params=pltpu.CompilerParams(
            dimension_semantics=("parallel", "arbitrary"),
            vmem_limit_bytes=32 * 1024 * 1024,
        ),
        cost_estimate=pl.CostEstimate(
            flops=5 * n_pad * n,
            transcendentals=0,
            bytes_accessed=(n_pad * n * itemsize + (n_pad + n) * 4
                            + _NUM_CORES * (n + 1) * 4),
        ),
    )(diag_col, diag_row, scores_p)

    loss = jnp.sum(outs[0])
    if max_violation:
        loss = loss + jnp.sum(jnp.max(outs[1][:, 0, :], axis=0))
    else:
        loss = loss - jnp.float32(2.0 * n * max(float(margin), 0.0))
    return loss


def _reference_loss(scores, margin=0.0, max_violation=False):
    """Pure-JAX reference matching the PyTorch semantics."""
    s = scores.astype(jnp.float32)
    diag = jnp.diag(s).reshape(-1, 1)
    cost_s = jnp.maximum(margin + s - diag, 0.0)
    cost_im = jnp.maximum(margin + s - diag.T, 0.0)
    eye = jnp.eye(s.shape[0], dtype=bool)
    cost_s = jnp.where(eye, 0.0, cost_s)
    cost_im = jnp.where(eye, 0.0, cost_im)
    if max_violation:
        cost_s = jnp.max(cost_s, axis=1)
        cost_im = jnp.max(cost_im, axis=0)
    return jnp.sum(cost_s) + jnp.sum(cost_im)


if __name__ == "__main__":
    key = jax.random.PRNGKey(0)
    N = 8  # small batch of (image, caption) pairs -> (N, N) score matrix
    scores = jax.random.normal(key, (N, N), dtype=jnp.float32)
    margin = 0.2

    # float32 inputs
    for max_violation in (False, True):
        loss = jax.block_until_ready(
            contrastive_loss(scores, margin=margin, max_violation=max_violation))
        ref = _reference_loss(scores, margin=margin, max_violation=max_violation)
        assert jnp.allclose(loss, ref, rtol=1e-5, atol=1e-5), (max_violation, loss, ref)

    # bfloat16 inputs (kernel streams native dtype, upcasts per tile in vregs)
    scores_bf16 = scores.astype(jnp.bfloat16)
    for max_violation in (False, True):
        loss = jax.block_until_ready(
            contrastive_loss(scores_bf16, margin=margin, max_violation=max_violation))
        ref = _reference_loss(scores_bf16, margin=margin, max_violation=max_violation)
        assert jnp.allclose(loss, ref, rtol=1e-4, atol=1e-4), (max_violation, loss, ref)

    # awkward N exercising the row-padding path
    N2 = 13
    scores2 = jax.random.normal(jax.random.PRNGKey(1), (N2, N2), dtype=jnp.float32)
    for max_violation in (False, True):
        loss = jax.block_until_ready(
            contrastive_loss(scores2, margin=margin, max_violation=max_violation))
        ref = _reference_loss(scores2, margin=margin, max_violation=max_violation)
        assert jnp.allclose(loss, ref, rtol=1e-5, atol=1e-5), (max_violation, loss, ref)

    print("KERNEL_OK")
</pallas_src>

<mosaic_0001>
module attributes {stable_mosaic.version = 11 : i64} {
  func.func @_contrastive_loss_kernel(%arg0: i32, %arg1: i32, %arg2: memref<8x1xf32, #tpu.memory_space<vmem>>, %arg3: memref<1x8xf32, #tpu.memory_space<vmem>>, %arg4: memref<8x8xf32, #tpu.memory_space<vmem>>, %arg5: memref<1x1x1xf32, #tpu.memory_space<vmem>>) attributes {dimension_semantics = [#tpu.dimension_semantics<parallel>, #tpu.dimension_semantics<arbitrary>], iteration_bounds = array<i64: 2, 1>, scalar_prefetch = 0 : i64, scratch_operands = 0 : i64, tpu.core_type = #tpu.core_type<tc>, window_params = [{transform_indices = @transform_0, window_bounds = array<i64: 8, 1>}, {pipeline_mode = #tpu.pipeline_mode<synchronous>, transform_indices = @transform_1, window_bounds = array<i64: 1, 8>}, {transform_indices = @transform_2, window_bounds = array<i64: 8, 8>}, {transform_indices = @transform_3, window_bounds = array<i64: 1, 1, 1>}]} {
    %c0_i32 = arith.constant 0 : i32
    %0 = arith.cmpi eq, %arg1, %c0_i32 : i32
    %1 = arith.extui %0 : i1 to i32
    %c0_i32_0 = arith.constant 0 : i32
    %2 = arith.cmpi ne, %1, %c0_i32_0 : i32
    scf.if %2 {
      %cst_14 = arith.constant 0.000000e+00 : f32
      %26 = vector.broadcast %cst_14 : f32 to vector<1x1xf32>
      %c0_15 = arith.constant 0 : index
      %c0_16 = arith.constant 0 : index
      %c0_17 = arith.constant 0 : index
      %27 = vector.load %arg5[%c0_15, %c0_16, %c0_17] : memref<1x1x1xf32, #tpu.memory_space<vmem>>, vector<1x1x1xf32>
      %28 = vector.shape_cast %27 : vector<1x1x1xf32> to vector<1x1xf32>
      %29 = vector.shape_cast %26 : vector<1x1xf32> to vector<1x1x1xf32>
      tpu.vector_store %arg5[%c0_15, %c0_16, %c0_17], %29 {strides = array<i32>} : memref<1x1x1xf32, #tpu.memory_space<vmem>>, vector<1x1x1xf32>,
    } else {
    }
    %c0 = arith.constant 0 : index
    %c0_1 = arith.constant 0 : index
    %3 = vector.load %arg4[%c0, %c0_1] : memref<8x8xf32, #tpu.memory_space<vmem>>, vector<8x8xf32>
    %c0_2 = arith.constant 0 : index
    %c0_3 = arith.constant 0 : index
    %4 = vector.load %arg2[%c0_2, %c0_3] : memref<8x1xf32, #tpu.memory_space<vmem>>, vector<8x1xf32>
    %c0_4 = arith.constant 0 : index
    %c0_5 = arith.constant 0 : index
    %5 = vector.load %arg3[%c0_4, %c0_5] : memref<1x8xf32, #tpu.memory_space<vmem>>, vector<1x8xf32>
    %6 = vector.broadcast %4 : vector<8x1xf32> to vector<8x8xf32>
    %7 = arith.addf %3, %6 : vector<8x8xf32>
    %cst = arith.constant 0.000000e+00 : f32
    %8 = vector.broadcast %cst : f32 to vector<8x8xf32>
    %9 = arith.maximumf %7, %8 : vector<8x8xf32>
    %10 = vector.broadcast %5 : vector<1x8xf32> to vector<8x8xf32>
    %11 = arith.addf %3, %10 : vector<8x8xf32>
    %cst_6 = arith.constant 0.000000e+00 : f32
    %12 = vector.broadcast %cst_6 : f32 to vector<8x8xf32>
    %13 = arith.maximumf %11, %12 : vector<8x8xf32>
    %c0_7 = arith.constant 0 : index
    %c0_8 = arith.constant 0 : index
    %c0_9 = arith.constant 0 : index
    %14 = vector.load %arg5[%c0_7, %c0_8, %c0_9] : memref<1x1x1xf32, #tpu.memory_space<vmem>>, vector<1x1x1xf32>
    %15 = vector.shape_cast %14 : vector<1x1x1xf32> to vector<1x1xf32>
    %16 = arith.addf %9, %13 : vector<8x8xf32>
    %17 = vector.shape_cast %16 : vector<8x8xf32> to vector<1x8x8xf32>
    %cst_10 = arith.constant dense<0.000000e+00> : vector<1xf32>
    %18 = vector.multi_reduction <add>, %17, %cst_10 [1, 2] : vector<1x8x8xf32> to vector<1xf32>
    %19 = vector.shape_cast %18 : vector<1xf32> to vector<1x1x1xf32>
    %20 = vector.extract %19[0, 0, 0] : f32 from vector<1x1x1xf32>
    %21 = vector.broadcast %20 : f32 to vector<1x1xf32>
    %22 = arith.addf %15, %21 : vector<1x1xf32>
    %c0_11 = arith.constant 0 : index
    %c0_12 = arith.constant 0 : index
    %c0_13 = arith.constant 0 : index
    %23 = vector.load %arg5[%c0_11, %c0_12, %c0_13] : memref<1x1x1xf32, #tpu.memory_space<vmem>>, vector<1x1x1xf32>
    %24 = vector.shape_cast %23 : vector<1x1x1xf32> to vector<1x1xf32>
    %25 = vector.shape_cast %22 : vector<1x1xf32> to vector<1x1x1xf32>
    tpu.vector_store %arg5[%c0_11, %c0_12, %c0_13], %25 {strides = array<i32>} : memref<1x1x1xf32, #tpu.memory_space<vmem>>, vector<1x1x1xf32>,
    return
  }
  func.func @transform_0(%arg0: i32, %arg1: i32) -> (i32, i32) {
    %c1_i32 = arith.constant 1 : i32
    %0 = arith.muli %arg0, %c1_i32 : i32
    %1 = arith.addi %0, %arg1 : i32
    %c0_i32 = arith.constant 0 : i32
    %c0_i32_0 = arith.constant 0 : i32
    return %1, %c0_i32 : i32, i32
  }
  func.func @transform_1(%arg0: i32, %arg1: i32) -> (i32, i32) {
    %c0_i32 = arith.constant 0 : i32
    %c0_i32_0 = arith.constant 0 : i32
    %c0_i32_1 = arith.constant 0 : i32
    return %c0_i32, %c0_i32_0 : i32, i32
  }
  func.func @transform_2(%arg0: i32, %arg1: i32) -> (i32, i32) {
    %c1_i32 = arith.constant 1 : i32
    %0 = arith.muli %arg0, %c1_i32 : i32
    %1 = arith.addi %0, %arg1 : i32
    %c0_i32 = arith.constant 0 : i32
    %c0_i32_0 = arith.constant 0 : i32
    return %1, %c0_i32 : i32, i32
  }
  func.func @transform_3(%arg0: i32, %arg1: i32) -> (i32, i32, i32) {
    %c0_i32 = arith.constant 0 : i32
    %c0_i32_0 = arith.constant 0 : i32
    %c0_i32_1 = arith.constant 0 : i32
    return %arg0, %c0_i32, %c0_i32_0 : i32, i32, i32
  }
}

</mosaic_0001>

<llo_original>
// kernel: tpu_custom_call.1
$region0: #{tpu_custom_call.1}
  #allocation0 [shape = 'u32[]', space=smem, size = 0x4, offset = 0x4, fixed_abs, tag = 'smem constant byte address 0x4 - core index']
  #allocation1 [shape = 'u32[144,128]{1,0:T(1,128)}', space=vmem, size = 0x12000, scoped, tag = 'internal scratch']
  %s0 = inlined_call_operand.vmem [shape: f32[16,1], index: 0, kind: input, shape index: {}]
  %s1 = inlined_call_operand.vmem [shape: f32[1,8], index: 1, kind: input, shape index: {}]
  %s2 = inlined_call_operand.vmem [shape: f32[16,8], index: 2, kind: input, shape index: {}]
  %s3 = inlined_call_operand.vmem [shape: f32[2,1,1], index: 3, kind: output, shape index: {}]
  %s4 = sld [smem:[#allocation0]]
  $region49: #{tpu_custom_call.1} parent=0
    _
  %s6 = ssub.s32 1, %s4
  %s7 = scalar_select 0, %s6, %s4
  loop: start=0, step=1, limit=4
  $region2: #{tpu_custom_call.1} parent=0 // loop_pre_header
    _
  $region3: #{tpu_custom_call.1} parent=0 // loop_header
    %s9 = sphi 0, %s13
    %p10 = scmp.ge.s32.totalorder %s9, 4
    %s16 = sphi 0, %s28
    %s17 = sphi 0, %s24
    %s18 = sphi 0, %s16
    %s19 = sphi 0, %s17
    %s20 = sphi 0, %s18
    %s21 = sphi 0, %s19
    %s33 = sphi 0, %s35
    %s36 = sphi 0, %s33
    %s37 = sphi 0, %s36
    %s53 = sphi 0, %s37
    %s57 = sphi 0, %s57
    %s59 = sphi 0, %s57
    %s60 = sphi 0, %s59
    %s74 = sphi 0, %s60
    %s82 = sphi 0, %s84
    %s85 = sphi 0, %s82
    %s86 = sphi 0, %s85
    %s102 = sphi 0, %s86
    %s108 = sphi 0, %s110
    %s111 = sphi 0, %s108
    %s112 = sphi 0, %s111
    %s128 = sphi 0, %s112
  $region4: #{tpu_custom_call.1} parent=0 // loop_header_branch
    %12 = sbr.rel (%p10) target = $region8
  $region5: #{tpu_custom_call.1} parent=0 // loop_body
    %s14 = ssub.s32 %s9, 1
    %s15 = ssub.s32 %s9, 2
    %s22 = sadd.s32 1, %s17
    %p23 = scmp.ge.s32.totalorder %s22, 1
    %s24 = scalar_select %p23, 0, %s22
    %s25 = sadd.s32 1, %s16
    %s26 = scalar_select %p23, %s25, %s16
    %p27 = scmp.ge.s32.totalorder %s26, 2
    %s28 = scalar_select %p27, 0, %s26
    %s29 = sadd.s32 %s16, %s17
    %s30 = sadd.s32 %s28, %s24
    %s31 = ssub.s32 %s29, %s30
    %p32 = scmp.eq.s32.totalorder %s31, 0
    %s34 = sadd.s32 %s33, 1
    %s35 = scalar_select %p32, %s33, %s34
    %p38 = pneg %p32
    %p39 = scmp.eq.s32.totalorder %s9, 1
    %p40 = por %p38, %p39
    %p41 = scmp.ne.s32.totalorder %s33, %s36
    %p42 = scmp.eq.s32.totalorder %s9, 0
    %p43 = por %p41, %p42
    %p44 = scmp.ne.s32.totalorder %s33, %s36
    %p45 = scmp.eq.s32.totalorder %s14, 1
    %p46 = por %p44, %p45
    %p47 = scmp.ne.s32.totalorder %s36, %s37
    %p48 = scmp.eq.s32.totalorder %s14, 0
    %p49 = por %p47, %p48
    %p50 = scmp.ne.s32.totalorder %s36, %s37
    %p51 = scmp.eq.s32.totalorder %s15, 1
    %p52 = por %p50, %p51
    %p54 = scmp.ne.s32.totalorder %s37, %s53
    %p55 = scmp.eq.s32.totalorder %s15, 0
    %p56 = por %p54, %p55
    %s58 = sadd.s32 %s57, 1
    %p61 = scmp.eq.s32.totalorder %s9, 1
    %p62 = scmp.ne.s32.totalorder %s57, %s59
    %p63 = scmp.eq.s32.totalorder %s9, 0
    %p64 = por %p62, %p63
    %p65 = scmp.ne.s32.totalorder %s57, %s59
    %p66 = scmp.eq.s32.totalorder %s14, 1
    %p67 = por %p65, %p66
    %p68 = scmp.ne.s32.totalorder %s59, %s60
    %p69 = scmp.eq.s32.totalorder %s14, 0
    %p70 = por %p68, %p69
    %p71 = scmp.ne.s32.totalorder %s59, %s60
    %p72 = scmp.eq.s32.totalorder %s15, 1
    %p73 = por %p71, %p72
    %p75 = scmp.ne.s32.totalorder %s60, %s74
    %p76 = scmp.eq.s32.totalorder %s15, 0
    %p77 = por %p75, %p76
    %s78 = sadd.s32 %s16, %s17
    %s79 = sadd.s32 %s28, %s24
    %s80 = ssub.s32 %s78, %s79
    %p81 = scmp.eq.s32.totalorder %s80, 0
    %s83 = sadd.s32 %s82, 1
    %s84 = scalar_select %p81, %s82, %s83
    %p87 = pneg %p81
    %p88 = scmp.eq.s32.totalorder %s9, 1
    %p89 = por %p87, %p88
    %p90 = scmp.ne.s32.totalorder %s82, %s85
    %p91 = scmp.eq.s32.totalorder %s9, 0
    %p92 = por %p90, %p91
    %p93 = scmp.ne.s32.totalorder %s82, %s85
    %p94 = scmp.eq.s32.totalorder %s14, 1
    %p95 = por %p93, %p94
    %p96 = scmp.ne.s32.totalorder %s85, %s86
    %p97 = scmp.eq.s32.totalorder %s14, 0
    %p98 = por %p96, %p97
    %p99 = scmp.ne.s32.totalorder %s85, %s86
    %p100 = scmp.eq.s32.totalorder %s15, 1
    %p101 = por %p99, %p100
    %p103 = scmp.ne.s32.totalorder %s86, %s102
    %p104 = scmp.eq.s32.totalorder %s15, 0
    %p105 = por %p103, %p104
    %s106 = ssub.s32 %s16, %s28
    %p107 = scmp.eq.s32.totalorder %s106, 0
    %s109 = sadd.s32 %s108, 1
    %s110 = scalar_select %p107, %s108, %s109
    %p113 = pneg %p107
    %p114 = scmp.eq.s32.totalorder %s9, 1
    %p115 = por %p113, %p114
    %p116 = scmp.ne.s32.totalorder %s108, %s111
    %p117 = scmp.eq.s32.totalorder %s9, 0
    %p118 = por %p116, %p117
    %p119 = scmp.ne.s32.totalorder %s108, %s111
    %p120 = scmp.eq.s32.totalorder %s14, 1
    %p121 = por %p119, %p120
    %p122 = scmp.ne.s32.totalorder %s111, %s112
    %p123 = scmp.eq.s32.totalorder %s14, 0
    %p124 = por %p122, %p123
    %p125 = scmp.ne.s32.totalorder %s111, %s112
    %p126 = scmp.eq.s32.totalorder %s15, 1
    %p127 = por %p125, %p126
    %p129 = scmp.ne.s32.totalorder %s112, %s128
    %p130 = scmp.eq.s32.totalorder %s15, 0
    %p131 = por %p129, %p130
    %p132 = scmp.le.s32.totalorder 1, %s9
    %p133 = scmp.lt.s32.totalorder %s9, 3
    %p134 = pnand %p132, %p133
    %p135 = pneg %p134
    // Predicated region
    $region9: #{tpu_custom_call.1} parent=5 // pred_check
      _
    $region10: #{tpu_custom_call.1} parent=5 // pred_check_branch
      %137 = sbr.rel (%p134) target = $region12
    $region11: #{tpu_custom_call.1} parent=5 // pred_region
      %s138 = ssub.s32 %s9, 1
      // Predicated region
      $region13: #{tpu_custom_call.1} parent=11 // pred_check
        %p139 = pneg %p70
      $region14: #{tpu_custom_call.1} parent=11 // pred_check_branch
        %141 = sbr.rel (%p139) target = $region16
      $region15: #{tpu_custom_call.1} parent=11 // pred_region
        _
      $region16: #{tpu_custom_call.1} parent=11 // pred_fallthru
        _
    $region12: #{tpu_custom_call.1} parent=5 // pred_fallthru
      _
    %p142 = scmp.lt.s32.totalorder %s9, 2
    // Predicated region
    $region17: #{tpu_custom_call.1} parent=5 // pred_check
      %p143 = pneg %p142
    $region18: #{tpu_custom_call.1} parent=5 // pred_check_branch
      %145 = sbr.rel (%p143) target = $region20
    $region19: #{tpu_custom_call.1} parent=5 // pred_region
      // Predicated region
      $region21: #{tpu_custom_call.1} parent=19 // pred_check
        %p146 = pneg %p43
      $region22: #{tpu_custom_call.1} parent=19 // pred_check_branch
        %148 = sbr.rel (%p146) target = $region24
      $region23: #{tpu_custom_call.1} parent=19 // pred_region
        %s149 = sadd.s32 %s16, %s17
        %p150 = scmp.lt.s32.totalorder %s149, 1
        %s151 = scalar_select %p150, %s149, 1
        %s152 = smul.addr %s151, 8
        %s153 = scalar_lea.vmem %s0, %s152
        %s154 = sadd.s32 %s16, %s17
      $region24: #{tpu_custom_call.1} parent=19 // pred_fallthru
        _
      // Predicated region
      $region25: #{tpu_custom_call.1} parent=19 // pred_check
        %p155 = pneg %p92
      $region26: #{tpu_custom_call.1} parent=19 // pred_check_branch
        %157 = sbr.rel (%p155) target = $region28
      $region27: #{tpu_custom_call.1} parent=19 // pred_region
        %s158 = sadd.s32 %s16, %s17
        %p159 = scmp.lt.s32.totalorder %s158, 1
        %s160 = scalar_select %p159, %s158, 1
        %s161 = smul.addr %s160, 8
        %s162 = scalar_lea.vmem %s2, %s161
        %s163 = sadd.s32 %s16, %s17
      $region28: #{tpu_custom_call.1} parent=19 // pred_fallthru
        _
    $region20: #{tpu_custom_call.1} parent=5 // pred_fallthru
      _
    %p164 = scmp.le.s32.totalorder 1, %s9
    %p165 = scmp.lt.s32.totalorder %s9, 3
    %p166 = pnand %p164, %p165
    %p167 = pneg %p166
    // Predicated region
    $region29: #{tpu_custom_call.1} parent=5 // pred_check
      _
    $region30: #{tpu_custom_call.1} parent=5 // pred_check_branch
      %169 = sbr.rel (%p166) target = $region32
    $region31: #{tpu_custom_call.1} parent=5 // pred_region
      %s170 = ssub.s32 %s9, 1
      %s171 = sadd.s32 %s18, %s19
      %p172 = scmp.lt.s32.totalorder %s171, 1
      %s173 = scalar_select %p172, %s171, 1
      %s174 = smul.addr %s173, 8
      %s175 = scalar_lea.vmem %s0, %s174
      %p176 = pneg %p49
      %p177 = pneg %p46
      %p178 = pneg %p70
      %p179 = pneg %p67
      %s180 = sadd.s32 %s18, %s19
      %p181 = scmp.lt.s32.totalorder %s180, 1
      %s182 = scalar_select %p181, %s180, 1
      %s183 = smul.addr %s182, 8
      %s184 = scalar_lea.vmem %s2, %s183
      %p185 = pneg %p98
      %p186 = pneg %p95
      %p187 = pneg %p124
      %p188 = pneg %p121
      %p189 = scmp.lt.s32.totalorder %s18, 1
      %s190 = scalar_select %p189, %s18, 1
      %s191 = scalar_lea.vmem %s3, %s190
      %s192 = sadd.s32 %s18, %s19
      %p193 = scmp.lt.s32.totalorder %s192, 1
      %s194 = scalar_select %p193, %s192, 1
      %s195 = smul.addr %s194, 8
      %s196 = scalar_lea.vmem %s0, %s195
      %s197 = sadd.s32 %s18, %s19
      %s198 = sadd.s32 %s18, %s19
      %p199 = scmp.lt.s32.totalorder %s198, 1
      %s200 = scalar_select %p199, %s198, 1
      %s201 = smul.addr %s200, 8
      %s202 = scalar_lea.vmem %s2, %s201
      %s203 = sadd.s32 %s18, %s19
      %p204 = scmp.lt.s32.totalorder %s18, 1
      %s205 = scalar_select %p204, %s18, 1
      %s206 = scalar_lea.vmem %s3, %s205
      %p207 = scmp.eq.s32.totalorder %s19, 0
      // Predicated region
      $region33: #{tpu_custom_call.1} parent=31 // pred_check
        %p208 = pneg %p207
      $region34: #{tpu_custom_call.1} parent=31 // pred_check_branch
        %210 = sbr.rel (%p208) target = $region36
      $region35: #{tpu_custom_call.1} parent=31 // pred_region
        %vm211 = vcmask 0
        %212 = vst.msk [vmem:[%s206] sm:$0x1] %vm211, 0.0
      $region36: #{tpu_custom_call.1} parent=31 // pred_fallthru
        _
      %v213 = vld [vmem:[%s202] sm:$0xff]
      %v214 = vld [vmem:[%s196] sm:$0xff]
      %v215 = vld [vmem:[%s1] sm:$0x1]
      %217 = vset.pattern.permute.xlu0 0
      %218 = vperm.xlu0 %217, %v214
      %v219 = vpop.permute.xlu0 %218
      %v221 = vadd.f32 %v213, %v219
      %v222 = vmax.f32 %v221, 0.0
      %v224 = vlaneseq
      %v225 = vshrl.u32 %v224, 7
      %v226 = vsub.s32 0, %v225
      %v227 = vrot.slane %v215, %v226
      %v229 = vadd.f32 %v213, %v227
      %v230 = vmax.f32 %v229, 0.0
      %v231 = vld [vmem:[%s206] sm:$0x1]
      %v232 = vadd.f32 %v222, %v230
      %vm233 = vcmask 64512
      %v234 = vsel %vm233, %v232, 0.0
      %235 = vadd.xlane.f32.xlu0 %v234
      %v236 = vpop.xlane.xlu0 %235
      %v237 = vrot.slane %v236, 4
      %v238 = vadd.f32 %v236, %v237
      %v239 = vrot.slane %v238, 2
      %v240 = vadd.f32 %v238, %v239
      %v241 = vrot.slane %v240, 1
      %v242 = vadd.f32 %v240, %v241
      %s243 = vtos %v242
      %v244 = vstv %s243
      %v245 = vadd.f32 %v231, %v244
      %vm246 = vcmask 0
      %247 = vst.msk [vmem:[%s206] sm:$0x1] %vm246, %v245
      %p248 = scmp.lt.s32.totalorder %s18, 1
      %s249 = scalar_select %p248, %s18, 1
      %s250 = scalar_lea.vmem %s3, %s249
      // Predicated region
      $region37: #{tpu_custom_call.1} parent=31 // pred_check
        %p251 = pneg %p121
      $region38: #{tpu_custom_call.1} parent=31 // pred_check_branch
        %253 = sbr.rel (%p251) target = $region40
      $region39: #{tpu_custom_call.1} parent=31 // pred_region
        _
      $region40: #{tpu_custom_call.1} parent=31 // pred_fallthru
        _
    $region32: #{tpu_custom_call.1} parent=5 // pred_fallthru
      _
    %p254 = scmp.le.s32.totalorder 2, %s9
    // Predicated region
    $region41: #{tpu_custom_call.1} parent=5 // pred_check
      %p255 = pneg %p254
    $region42: #{tpu_custom_call.1} parent=5 // pred_check_branch
      %257 = sbr.rel (%p255) target = $region44
    $region43: #{tpu_custom_call.1} parent=5 // pred_region
      %s258 = ssub.s32 %s9, 2
      // Predicated region
      $region45: #{tpu_custom_call.1} parent=43 // pred_check
        %p259 = pneg %p127
      $region46: #{tpu_custom_call.1} parent=43 // pred_check_branch
        %261 = sbr.rel (%p259) target = $region48
      $region47: #{tpu_custom_call.1} parent=43 // pred_region
        %p262 = scmp.lt.s32.totalorder %s20, 1
        %s263 = scalar_select %p262, %s20, 1
        %s264 = scalar_lea.vmem %s3, %s263
      $region48: #{tpu_custom_call.1} parent=43 // pred_fallthru
        _
    $region44: #{tpu_custom_call.1} parent=5 // pred_fallthru
      _
  $region6: #{tpu_custom_call.1} parent=0 // loop_footer
    %s13 = sadd.s32 1, %s9
  $region7: #{tpu_custom_call.1} parent=0 // loop_footer_branch
    %8 = sbr.rel target = $region3
  $region8: #{tpu_custom_call.1} parent=0 // loop_exit
    _

</llo_original>
